<compile_context>
chip_gen: v6e
topology: v6e:2x2x1
jax: 0.10.0
libtpu: 0.0.40
codegen_flags: <defaults>
</compile_context>

<pallas_src>
import math
import jax
import jax.numpy as jnp
from jax import lax
from jax.experimental import pallas as pl
from jax.experimental.pallas import tpu as pltpu

EPS = 1e-5          # nn.BatchNorm2d default eps
LANES = 128


def _round_up(x, m):
    return (x + m - 1) // m * m


def _pick_row_tile(h, max_rows=8):
    """Largest even divisor of h that is <= max_rows (conv rows per grid step)."""
    for t in range(min(h, max_rows), 1, -1):
        if h % t == 0 and t % 2 == 0:
            return t
    return h


# ------------------------------------------------------------------ kernel 1
def conv_stats_kernel(xp_ref, w_ref, y_ref, stats_ref, patch_ref):
    """Conv3x3 on one row-tile + per-tile BN partial statistics.

    xp_ref    : (1, H+2, W+2, Cin) f32   padded input image.  Its block index ignores the
                                         row-tile grid axis, so it is DMA'd once per image.
    w_ref     : (9*Cin, Cp)        bf16  conv weight, K ordered (ky, kx, cin)
    y_ref     : (1, TR, W, Cp)     f32   conv output tile (pre-BN)
    stats_ref : (1, 1, 2, Cp)      f32   per-tile [sum, sum_sq] over the TR*W pixels
    patch_ref : (TR*W, 9*Cin)      f32   VMEM scratch: im2col patch matrix
    """
    _, TR, W, Cp = y_ref.shape
    Cin = xp_ref.shape[-1]
    r = pl.program_id(1)
    row0 = pl.multiple_of(r * TR, TR)

    # im2col: 9 small direct ref loads (no full-image value materialized) into one
    # (TR*W, 9*Cin) patch matrix, then a single MXU matmul instead of 9 tiny K=Cin dots.
    for ky in range(3):
        for kx in range(3):
            k = ky * 3 + kx
            tap = xp_ref[0, pl.ds(row0 + ky, TR), kx:kx + W, :]       # (TR, W, Cin)
            patch_ref[:, k * Cin:(k + 1) * Cin] = tap.reshape(TR * W, Cin)

    acc = jnp.dot(patch_ref[...].astype(jnp.bfloat16), w_ref[...],
                  preferred_element_type=jnp.float32)                 # (TR*W, Cp)

    # one-pass BN partial stats (E[x], E[x^2] form) per channel
    s1 = jnp.sum(acc, axis=0, keepdims=True)
    s2 = jnp.sum(acc * acc, axis=0, keepdims=True)
    stats_ref[...] = jnp.concatenate([s1, s2], axis=0).reshape(1, 1, 2, Cp)

    y_ref[...] = acc.reshape(1, TR, W, Cp)


# ------------------------------------------------------------------ kernel 2
def bn_pool_relu_kernel(y_ref, scale_ref, shift_ref, o_ref):
    """Fused BN affine -> 2x2 max-pool -> ReLU on one row-tile.

    y_ref     : (1, TR, W, Cp)        f32  conv output tile
    scale_ref : (1, Cp)               f32  gamma * rsqrt(var + eps)
    shift_ref : (1, Cp)               f32  beta - mean * scale
    o_ref     : (1, TR//2, W//2, Cp)  f32
    """
    _, TR, W, Cp = y_ref.shape
    TRp, Wp = TR // 2, W // 2

    z = y_ref[0] * scale_ref[...] + shift_ref[...]                    # (TR, W, Cp)

    # 2x2 max-pool: vertical pairs first (cheap major-axis split halves the data),
    # then horizontal pairs, all on the lane-dense (.., .., Cp=128) layout.
    zv = z.reshape(TRp, 2, W, Cp)
    zv = jnp.maximum(zv[:, 0], zv[:, 1])                              # (TRp, W, Cp)
    zh = zv.reshape(TRp, Wp, 2, Cp)
    zp = jnp.maximum(zh[:, :, 0, :], zh[:, :, 1, :])                  # (TRp, Wp, Cp)

    # ReLU after pooling (ReLU is monotone -> identical result, 4x fewer elements)
    o_ref[...] = jnp.maximum(zp, 0.0).reshape(1, TRp, Wp, Cp)


# ------------------------------------------------------------------ wrapper
def conv_block(x_nchw, weight_oihw, bias, gamma, beta):
    """NCHW in / NCHW out, matching ConvBlock(indim, outdim, pool=True) forward."""
    del bias  # per-channel additive conv bias cancels exactly in training-mode BN
    N, Cin, H, W = x_nchw.shape
    Cout = weight_oihw.shape[0]
    assert H % 2 == 0 and W % 2 == 0

    TR = _pick_row_tile(H)                 # conv rows per grid step (even, divides H)
    nR = H // TR
    Cp = _round_up(Cout, LANES)            # lane-dense channel axis
    K9 = 9 * Cin
    Hp, Wp, TRp = H // 2, W // 2, TR // 2

    # --- wrapper-side glue (plain XLA): layout transform, padding, weight reshape
    # TODO(synk): load H/W halo rows via index_map + border masking instead of
    # materializing this zero-padded copy of the input in HBM.
    x_nhwc = jnp.transpose(x_nchw, (0, 2, 3, 1)).astype(jnp.float32)
    xp = jnp.pad(x_nhwc, ((0, 0), (1, 1), (1, 1), (0, 0)))

    w = jnp.transpose(weight_oihw, (2, 3, 1, 0)).reshape(K9, Cout)    # (ky,kx,ci) x co
    w = jnp.pad(w, ((0, 0), (0, Cp - Cout))).astype(jnp.bfloat16)     # bf16 MXU input

    cparams = pltpu.CompilerParams(
        dimension_semantics=("parallel", "parallel"),   # megacore-friendly on v7x
        vmem_limit_bytes=32 * 1024 * 1024,              # safe on v5e/v6e/v7x scoped VMEM
    )

    # --- pass 1: conv + BN partial statistics, tiled over (batch, row tiles)
    conv_out, stats = pl.pallas_call(
        conv_stats_kernel,
        grid=(N, nR),
        in_specs=[
            pl.BlockSpec((1, H + 2, W + 2, Cin), lambda n, r: (n, 0, 0, 0)),
            pl.BlockSpec((K9, Cp), lambda n, r: (0, 0)),
        ],
        out_specs=[
            pl.BlockSpec((1, TR, W, Cp), lambda n, r: (n, r, 0, 0)),
            pl.BlockSpec((1, 1, 2, Cp), lambda n, r: (n, r, 0, 0)),
        ],
        out_shape=[
            jax.ShapeDtypeStruct((N, H, W, Cp), jnp.float32),
            jax.ShapeDtypeStruct((N, nR, 2, Cp), jnp.float32),
        ],
        scratch_shapes=[pltpu.VMEM((TR * W, K9), jnp.float32)],
        compiler_params=cparams,
    )(xp, w)

    # --- combine the tiny per-tile partials and fold BN into per-channel scale/shift
    m = jnp.float32(N * H * W)
    s = jnp.sum(stats, axis=(0, 1))                        # (2, Cp)
    mean = s[0] / m
    var = jnp.maximum(s[1] / m - mean * mean, 0.0)         # biased variance (training BN)
    gamma_p = jnp.pad(gamma.astype(jnp.float32), (0, Cp - Cout))
    beta_p = jnp.pad(beta.astype(jnp.float32), (0, Cp - Cout))
    scale = (gamma_p * lax.rsqrt(var + EPS)).reshape(1, Cp)
    shift = (beta_p - mean * (gamma_p * lax.rsqrt(var + EPS))).reshape(1, Cp)

    # --- pass 2: normalize -> 2x2 max-pool -> ReLU, same tiling
    out_nhwc = pl.pallas_call(
        bn_pool_relu_kernel,
        grid=(N, nR),
        in_specs=[
            pl.BlockSpec((1, TR, W, Cp), lambda n, r: (n, r, 0, 0)),
            pl.BlockSpec((1, Cp), lambda n, r: (0, 0)),
            pl.BlockSpec((1, Cp), lambda n, r: (0, 0)),
        ],
        out_specs=pl.BlockSpec((1, TRp, Wp, Cp), lambda n, r: (n, r, 0, 0)),
        out_shape=jax.ShapeDtypeStruct((N, Hp, Wp, Cp), jnp.float32),
        compiler_params=cparams,
    )(conv_out, scale, shift)

    return jnp.transpose(out_nhwc[..., :Cout], (0, 3, 1, 2))   # back to NCHW


if __name__ == "__main__":
    # Small shapes consistent with ConvBlock(indim=4, outdim=8, pool=True)
    N, Cin, Cout, H, W = 2, 4, 8, 16, 16

    key = jax.random.PRNGKey(0)
    kx, kw, kb = jax.random.split(key, 3)

    x = jax.random.normal(kx, (N, Cin, H, W), dtype=jnp.float32)

    # init_layer: conv weight ~ N(0, sqrt(2 / (3*3*outdim)))
    w_std = math.sqrt(2.0 / float(3 * 3 * Cout))
    weight = w_std * jax.random.normal(kw, (Cout, Cin, 3, 3), dtype=jnp.float32)
    # conv bias: PyTorch default init (unused by the kernel -- no-op before training BN)
    b_bound = 1.0 / math.sqrt(Cin * 3 * 3)
    bias = jax.random.uniform(kb, (Cout,), minval=-b_bound, maxval=b_bound,
                              dtype=jnp.float32)
    # BN: weight filled with 1, bias filled with 0 (init_layer)
    gamma = jnp.ones((Cout,), dtype=jnp.float32)
    beta = jnp.zeros((Cout,), dtype=jnp.float32)

    out = conv_block(x, weight, bias, gamma, beta)
    out = jax.block_until_ready(out)
    assert out.shape == (N, Cout, H // 2, W // 2), out.shape
    assert bool(jnp.all(jnp.isfinite(out)))
    print("KERNEL_OK")
</pallas_src>

<mosaic_0001>
module attributes {stable_mosaic.version = 11 : i64} {
  func.func @conv_stats_kernel(%arg0: i32, %arg1: i32, %arg2: memref<1x18x18x4xf32, #tpu.memory_space<vmem>>, %arg3: memref<36x128xbf16, #tpu.memory_space<vmem>>, %arg4: memref<1x8x16x128xf32, #tpu.memory_space<vmem>>, %arg5: memref<1x1x2x128xf32, #tpu.memory_space<vmem>>, %arg6: memref<128x36xf32, #tpu.memory_space<vmem>>) attributes {dimension_semantics = [#tpu.dimension_semantics<parallel>, #tpu.dimension_semantics<parallel>], iteration_bounds = array<i64: 2, 2>, scalar_prefetch = 0 : i64, scratch_operands = 1 : i64, tpu.core_type = #tpu.core_type<tc>, window_params = [{transform_indices = @transform_0, window_bounds = array<i64: 1, 18, 18, 4>}, {pipeline_mode = #tpu.pipeline_mode<synchronous>, transform_indices = @transform_1, window_bounds = array<i64: 36, 128>}, {transform_indices = @transform_2, window_bounds = array<i64: 1, 8, 16, 128>}, {transform_indices = @transform_3, window_bounds = array<i64: 1, 1, 2, 128>}]} {
    %c8_i32 = arith.constant 8 : i32
    %0 = arith.muli %arg1, %c8_i32 : i32
    %1 = tpu.assume_multiple %0, 8 : i32
    %c0_i32 = arith.constant 0 : i32
    %2 = arith.addi %1, %c0_i32 : i32
    %c0 = arith.constant 0 : index
    %3 = arith.index_cast %2 : i32 to index
    %c0_0 = arith.constant 0 : index
    %c0_1 = arith.constant 0 : index
    %4 = vector.load %arg2[%c0, %3, %c0_0, %c0_1] : memref<1x18x18x4xf32, #tpu.memory_space<vmem>>, vector<1x8x16x4xf32>
    %5 = vector.shape_cast %4 : vector<1x8x16x4xf32> to vector<8x16x4xf32>
    %6 = vector.shape_cast %5 : vector<8x16x4xf32> to vector<128x4xf32>
    %c0_2 = arith.constant 0 : index
    %c0_3 = arith.constant 0 : index
    %7 = vector.load %arg6[%c0_2, %c0_3] : memref<128x36xf32, #tpu.memory_space<vmem>>, vector<128x4xf32>
    tpu.vector_store %arg6[%c0_2, %c0_3], %6 {strides = array<i32>} : memref<128x36xf32, #tpu.memory_space<vmem>>, vector<128x4xf32>,
    %c0_i32_4 = arith.constant 0 : i32
    %8 = arith.addi %1, %c0_i32_4 : i32
    %c0_5 = arith.constant 0 : index
    %9 = arith.index_cast %8 : i32 to index
    %c1 = arith.constant 1 : index
    %c0_6 = arith.constant 0 : index
    %10 = vector.load %arg2[%c0_5, %9, %c1, %c0_6] : memref<1x18x18x4xf32, #tpu.memory_space<vmem>>, vector<1x8x16x4xf32>
    %11 = vector.shape_cast %10 : vector<1x8x16x4xf32> to vector<8x16x4xf32>
    %12 = vector.shape_cast %11 : vector<8x16x4xf32> to vector<128x4xf32>
    %c0_7 = arith.constant 0 : index
    %c4 = arith.constant 4 : index
    %13 = vector.load %arg6[%c0_7, %c4] : memref<128x36xf32, #tpu.memory_space<vmem>>, vector<128x4xf32>
    tpu.vector_store %arg6[%c0_7, %c4], %12 {strides = array<i32>} : memref<128x36xf32, #tpu.memory_space<vmem>>, vector<128x4xf32>,
    %c0_i32_8 = arith.constant 0 : i32
    %14 = arith.addi %1, %c0_i32_8 : i32
    %c0_9 = arith.constant 0 : index
    %15 = arith.index_cast %14 : i32 to index
    %c2 = arith.constant 2 : index
    %c0_10 = arith.constant 0 : index
    %16 = vector.load %arg2[%c0_9, %15, %c2, %c0_10] : memref<1x18x18x4xf32, #tpu.memory_space<vmem>>, vector<1x8x16x4xf32>
    %17 = vector.shape_cast %16 : vector<1x8x16x4xf32> to vector<8x16x4xf32>
    %18 = vector.shape_cast %17 : vector<8x16x4xf32> to vector<128x4xf32>
    %c0_11 = arith.constant 0 : index
    %c8 = arith.constant 8 : index
    %19 = vector.load %arg6[%c0_11, %c8] : memref<128x36xf32, #tpu.memory_space<vmem>>, vector<128x4xf32>
    tpu.vector_store %arg6[%c0_11, %c8], %18 {strides = array<i32>} : memref<128x36xf32, #tpu.memory_space<vmem>>, vector<128x4xf32>,
    %c1_i32 = arith.constant 1 : i32
    %20 = arith.addi %1, %c1_i32 : i32
    %c0_12 = arith.constant 0 : index
    %21 = arith.index_cast %20 : i32 to index
    %c0_13 = arith.constant 0 : index
    %c0_14 = arith.constant 0 : index
    %22 = vector.load %arg2[%c0_12, %21, %c0_13, %c0_14] : memref<1x18x18x4xf32, #tpu.memory_space<vmem>>, vector<1x8x16x4xf32>
    %23 = vector.shape_cast %22 : vector<1x8x16x4xf32> to vector<8x16x4xf32>
    %24 = vector.shape_cast %23 : vector<8x16x4xf32> to vector<128x4xf32>
    %c0_15 = arith.constant 0 : index
    %c12 = arith.constant 12 : index
    %25 = vector.load %arg6[%c0_15, %c12] : memref<128x36xf32, #tpu.memory_space<vmem>>, vector<128x4xf32>
    tpu.vector_store %arg6[%c0_15, %c12], %24 {strides = array<i32>} : memref<128x36xf32, #tpu.memory_space<vmem>>, vector<128x4xf32>,
    %c1_i32_16 = arith.constant 1 : i32
    %26 = arith.addi %1, %c1_i32_16 : i32
    %c0_17 = arith.constant 0 : index
    %27 = arith.index_cast %26 : i32 to index
    %c1_18 = arith.constant 1 : index
    %c0_19 = arith.constant 0 : index
    %28 = vector.load %arg2[%c0_17, %27, %c1_18, %c0_19] : memref<1x18x18x4xf32, #tpu.memory_space<vmem>>, vector<1x8x16x4xf32>
    %29 = vector.shape_cast %28 : vector<1x8x16x4xf32> to vector<8x16x4xf32>
    %30 = vector.shape_cast %29 : vector<8x16x4xf32> to vector<128x4xf32>
    %c0_20 = arith.constant 0 : index
    %c16 = arith.constant 16 : index
    %31 = vector.load %arg6[%c0_20, %c16] : memref<128x36xf32, #tpu.memory_space<vmem>>, vector<128x4xf32>
    tpu.vector_store %arg6[%c0_20, %c16], %30 {strides = array<i32>} : memref<128x36xf32, #tpu.memory_space<vmem>>, vector<128x4xf32>,
    %c1_i32_21 = arith.constant 1 : i32
    %32 = arith.addi %1, %c1_i32_21 : i32
    %c0_22 = arith.constant 0 : index
    %33 = arith.index_cast %32 : i32 to index
    %c2_23 = arith.constant 2 : index
    %c0_24 = arith.constant 0 : index
    %34 = vector.load %arg2[%c0_22, %33, %c2_23, %c0_24] : memref<1x18x18x4xf32, #tpu.memory_space<vmem>>, vector<1x8x16x4xf32>
    %35 = vector.shape_cast %34 : vector<1x8x16x4xf32> to vector<8x16x4xf32>
    %36 = vector.shape_cast %35 : vector<8x16x4xf32> to vector<128x4xf32>
    %c0_25 = arith.constant 0 : index
    %c20 = arith.constant 20 : index
    %37 = vector.load %arg6[%c0_25, %c20] : memref<128x36xf32, #tpu.memory_space<vmem>>, vector<128x4xf32>
    tpu.vector_store %arg6[%c0_25, %c20], %36 {strides = array<i32>} : memref<128x36xf32, #tpu.memory_space<vmem>>, vector<128x4xf32>,
    %c2_i32 = arith.constant 2 : i32
    %38 = arith.addi %1, %c2_i32 : i32
    %c0_26 = arith.constant 0 : index
    %39 = arith.index_cast %38 : i32 to index
    %c0_27 = arith.constant 0 : index
    %c0_28 = arith.constant 0 : index
    %40 = vector.load %arg2[%c0_26, %39, %c0_27, %c0_28] : memref<1x18x18x4xf32, #tpu.memory_space<vmem>>, vector<1x8x16x4xf32>
    %41 = vector.shape_cast %40 : vector<1x8x16x4xf32> to vector<8x16x4xf32>
    %42 = vector.shape_cast %41 : vector<8x16x4xf32> to vector<128x4xf32>
    %c0_29 = arith.constant 0 : index
    %c24 = arith.constant 24 : index
    %43 = vector.load %arg6[%c0_29, %c24] : memref<128x36xf32, #tpu.memory_space<vmem>>, vector<128x4xf32>
    tpu.vector_store %arg6[%c0_29, %c24], %42 {strides = array<i32>} : memref<128x36xf32, #tpu.memory_space<vmem>>, vector<128x4xf32>,
    %c2_i32_30 = arith.constant 2 : i32
    %44 = arith.addi %1, %c2_i32_30 : i32
    %c0_31 = arith.constant 0 : index
    %45 = arith.index_cast %44 : i32 to index
    %c1_32 = arith.constant 1 : index
    %c0_33 = arith.constant 0 : index
    %46 = vector.load %arg2[%c0_31, %45, %c1_32, %c0_33] : memref<1x18x18x4xf32, #tpu.memory_space<vmem>>, vector<1x8x16x4xf32>
    %47 = vector.shape_cast %46 : vector<1x8x16x4xf32> to vector<8x16x4xf32>
    %48 = vector.shape_cast %47 : vector<8x16x4xf32> to vector<128x4xf32>
    %c0_34 = arith.constant 0 : index
    %c28 = arith.constant 28 : index
    %49 = vector.load %arg6[%c0_34, %c28] : memref<128x36xf32, #tpu.memory_space<vmem>>, vector<128x4xf32>
    tpu.vector_store %arg6[%c0_34, %c28], %48 {strides = array<i32>} : memref<128x36xf32, #tpu.memory_space<vmem>>, vector<128x4xf32>,
    %c2_i32_35 = arith.constant 2 : i32
    %50 = arith.addi %1, %c2_i32_35 : i32
    %c0_36 = arith.constant 0 : index
    %51 = arith.index_cast %50 : i32 to index
    %c2_37 = arith.constant 2 : index
    %c0_38 = arith.constant 0 : index
    %52 = vector.load %arg2[%c0_36, %51, %c2_37, %c0_38] : memref<1x18x18x4xf32, #tpu.memory_space<vmem>>, vector<1x8x16x4xf32>
    %53 = vector.shape_cast %52 : vector<1x8x16x4xf32> to vector<8x16x4xf32>
    %54 = vector.shape_cast %53 : vector<8x16x4xf32> to vector<128x4xf32>
    %c0_39 = arith.constant 0 : index
    %c32 = arith.constant 32 : index
    %55 = vector.load %arg6[%c0_39, %c32] : memref<128x36xf32, #tpu.memory_space<vmem>>, vector<128x4xf32>
    tpu.vector_store %arg6[%c0_39, %c32], %54 {strides = array<i32>} : memref<128x36xf32, #tpu.memory_space<vmem>>, vector<128x4xf32>,
    %c0_40 = arith.constant 0 : index
    %c0_41 = arith.constant 0 : index
    %56 = vector.load %arg6[%c0_40, %c0_41] : memref<128x36xf32, #tpu.memory_space<vmem>>, vector<128x36xf32>
    %57 = arith.truncf %56 : vector<128x36xf32> to vector<128x36xbf16>
    %c0_42 = arith.constant 0 : index
    %c0_43 = arith.constant 0 : index
    %58 = vector.load %arg3[%c0_42, %c0_43] : memref<36x128xbf16, #tpu.memory_space<vmem>>, vector<36x128xbf16>
    %cst = arith.constant dense<0.000000e+00> : vector<128x128xf32>
    %59 = tpu.matmul %57, %58, %cst {dimension_numbers = #tpu.dot_dimension_numbers<[1], [0], [0], [1], [0, 0, 1, 1], [], []>} : vector<128x36xbf16>, vector<36x128xbf16>, vector<128x128xf32> -> vector<128x128xf32>
    %cst_44 = arith.constant dense<0.000000e+00> : vector<128xf32>
    %60 = vector.multi_reduction <add>, %59, %cst_44 [0] : vector<128x128xf32> to vector<128xf32>
    %61 = vector.shape_cast %60 : vector<128xf32> to vector<1x128xf32>
    %62 = arith.mulf %59, %59 : vector<128x128xf32>
    %cst_45 = arith.constant dense<0.000000e+00> : vector<128xf32>
    %63 = vector.multi_reduction <add>, %62, %cst_45 [0] : vector<128x128xf32> to vector<128xf32>
    %64 = vector.shape_cast %63 : vector<128xf32> to vector<1x128xf32>
    %65 = tpu.concatenate %61, %64 in 0 : vector<1x128xf32>, vector<1x128xf32> -> vector<2x128xf32>
    %66 = vector.shape_cast %65 : vector<2x128xf32> to vector<1x1x2x128xf32>
    %c0_46 = arith.constant 0 : index
    %c0_47 = arith.constant 0 : index
    %c0_48 = arith.constant 0 : index
    %c0_49 = arith.constant 0 : index
    %67 = vector.load %arg5[%c0_46, %c0_47, %c0_48, %c0_49] : memref<1x1x2x128xf32, #tpu.memory_space<vmem>>, vector<1x1x2x128xf32>
    tpu.vector_store %arg5[%c0_46, %c0_47, %c0_48, %c0_49], %66 {strides = array<i32>} : memref<1x1x2x128xf32, #tpu.memory_space<vmem>>, vector<1x1x2x128xf32>,
    %68 = vector.shape_cast %59 : vector<128x128xf32> to vector<1x8x16x128xf32>
    %c0_50 = arith.constant 0 : index
    %c0_51 = arith.constant 0 : index
    %c0_52 = arith.constant 0 : index
    %c0_53 = arith.constant 0 : index
    %69 = vector.load %arg4[%c0_50, %c0_51, %c0_52, %c0_53] : memref<1x8x16x128xf32, #tpu.memory_space<vmem>>, vector<1x8x16x128xf32>
    tpu.vector_store %arg4[%c0_50, %c0_51, %c0_52, %c0_53], %68 {strides = array<i32>} : memref<1x8x16x128xf32, #tpu.memory_space<vmem>>, vector<1x8x16x128xf32>,
    return
  }
  func.func @transform_0(%arg0: i32, %arg1: i32) -> (i32, i32, i32, i32) {
    %c0_i32 = arith.constant 0 : i32
    %c0_i32_0 = arith.constant 0 : i32
    %c0_i32_1 = arith.constant 0 : i32
    %c0_i32_2 = arith.constant 0 : i32
    return %arg0, %c0_i32, %c0_i32_0, %c0_i32_1 : i32, i32, i32, i32
  }
  func.func @transform_1(%arg0: i32, %arg1: i32) -> (i32, i32) {
    %c0_i32 = arith.constant 0 : i32
    %c0_i32_0 = arith.constant 0 : i32
    %c0_i32_1 = arith.constant 0 : i32
    return %c0_i32, %c0_i32_0 : i32, i32
  }
  func.func @transform_2(%arg0: i32, %arg1: i32) -> (i32, i32, i32, i32) {
    %c0_i32 = arith.constant 0 : i32
    %c0_i32_0 = arith.constant 0 : i32
    %c0_i32_1 = arith.constant 0 : i32
    return %arg0, %arg1, %c0_i32, %c0_i32_0 : i32, i32, i32, i32
  }
  func.func @transform_3(%arg0: i32, %arg1: i32) -> (i32, i32, i32, i32) {
    %c0_i32 = arith.constant 0 : i32
    %c0_i32_0 = arith.constant 0 : i32
    %c0_i32_1 = arith.constant 0 : i32
    return %arg0, %arg1, %c0_i32, %c0_i32_0 : i32, i32, i32, i32
  }
}

</mosaic_0001>

<llo_original>
// kernel: tpu_custom_call.1
$region0: #{tpu_custom_call.1}
  #allocation0 [shape = 'u32[]', space=smem, size = 0x4, offset = 0x4, fixed_abs, tag = 'smem constant byte address 0x4 - core index']
  #allocation1 [shape = 'u32[144,128]{1,0:T(1,128)}', space=vmem, size = 0x12000, scoped, tag = 'internal scratch']
  #allocation2 [shape = 'f32[128,36]{1,0:T(8,128)}', space=vmem, size = 0x10000, scoped, tag = 'scratch operand']
  %s0 = inlined_call_operand.vmem [shape: f32[2,18,18,4], index: 0, kind: input, shape index: {}]
  %s1 = inlined_call_operand.vmem [shape: bf16[36,128], index: 1, kind: input, shape index: {}]
  %s2 = inlined_call_operand.hbm [shape: f32[2,16,16,128], index: 2, kind: output, shape index: {0}]
  %s3 = inlined_call_operand.hbm [shape: f32[2,2,2,128], index: 3, kind: output, shape index: {1}]
  %4 = xla_tuple %s2, %s3
  %s5 = sld [smem:[#allocation0]]
  $region49: #{tpu_custom_call.1} parent=0
    _
  %s7 = ssub.s32 1, %s5
  %s8 = scalar_select 0, %s7, %s5
  $region1: #{tpu_custom_call.1} parent=0
    #allocation3 [shape = 'u8[131072]{0}', space=vmem, size = 0x20000, scoped, tag = 'output window, operand 0']
    #allocation4 [shape = 's32[2]{0}', space=sflag, size = 0x8, scoped, tag = 'scoped memory for tpu_custom_call.1']
    #allocation5 [shape = 'u8[2048]{0}', space=vmem, size = 0x800, scoped, tag = 'output window, operand 1']
    #allocation6 [shape = 's32[2]{0}', space=sflag, size = 0x8, scoped, tag = 'scoped memory for tpu_custom_call.1']
    %9 = vsyncpa [#allocation4], 0
    %s10 = scalar_lea.sflag [#allocation4], 1
    %11 = vsyncpa %s10, 0
    %12 = vsyncpa [#allocation6], 0
    %s13 = scalar_lea.sflag [#allocation6], 1
    %14 = vsyncpa %s13, 0
    loop: start=0, step=1, limit=6
    $region2: #{tpu_custom_call.1} parent=1 // loop_pre_header
      _
    $region3: #{tpu_custom_call.1} parent=1 // loop_header
      %s16 = sphi 0, %s20
      %p17 = scmp.ge.s32.totalorder %s16, 6
      %s23 = sphi 0, %s35
      %s24 = sphi 0, %s31
      %s25 = sphi 0, %s23
      %s26 = sphi 0, %s24
      %s27 = sphi 0, %s25
      %s28 = sphi 0, %s26
      %s38 = sphi 0, %s40
      %s41 = sphi 0, %s38
      %s42 = sphi 0, %s41
      %s58 = sphi 0, %s42
      %s62 = sphi 0, %s62
      %s64 = sphi 0, %s62
      %s65 = sphi 0, %s64
      %s79 = sphi 0, %s65
      %s87 = sphi 0, %s89
      %s90 = sphi 0, %s87
      %s91 = sphi 0, %s90
      %s107 = sphi 0, %s91
      %s115 = sphi 0, %s117
      %s118 = sphi 0, %s115
      %s119 = sphi 0, %s118
      %s135 = sphi 0, %s119
    $region4: #{tpu_custom_call.1} parent=1 // loop_header_branch
      %19 = sbr.rel (%p17) target = $region8
    $region5: #{tpu_custom_call.1} parent=1 // loop_body
      %s21 = ssub.s32 %s16, 1
      %s22 = ssub.s32 %s16, 2
      %s29 = sadd.s32 1, %s24
      %p30 = scmp.ge.s32.totalorder %s29, 2
      %s31 = scalar_select %p30, 0, %s29
      %s32 = sadd.s32 1, %s23
      %s33 = scalar_select %p30, %s32, %s23
      %p34 = scmp.ge.s32.totalorder %s33, 2
      %s35 = scalar_select %p34, 0, %s33
      %s36 = ssub.s32 %s23, %s35
      %p37 = scmp.eq.s32.totalorder %s36, 0
      %s39 = sadd.s32 %s38, 1
      %s40 = scalar_select %p37, %s38, %s39
      %p43 = pneg %p37
      %p44 = scmp.eq.s32.totalorder %s16, 3
      %p45 = por %p43, %p44
      %p46 = scmp.ne.s32.totalorder %s38, %s41
      %p47 = scmp.eq.s32.totalorder %s16, 0
      %p48 = por %p46, %p47
      %p49 = scmp.ne.s32.totalorder %s38, %s41
      %p50 = scmp.eq.s32.totalorder %s21, 3
      %p51 = por %p49, %p50
      %p52 = scmp.ne.s32.totalorder %s41, %s42
      %p53 = scmp.eq.s32.totalorder %s21, 0
      %p54 = por %p52, %p53
      %p55 = scmp.ne.s32.totalorder %s41, %s42
      %p56 = scmp.eq.s32.totalorder %s22, 3
      %p57 = por %p55, %p56
      %p59 = scmp.ne.s32.totalorder %s42, %s58
      %p60 = scmp.eq.s32.totalorder %s22, 0
      %p61 = por %p59, %p60
      %s63 = sadd.s32 %s62, 1
      %p66 = scmp.eq.s32.totalorder %s16, 3
      %p67 = scmp.ne.s32.totalorder %s62, %s64
      %p68 = scmp.eq.s32.totalorder %s16, 0
      %p69 = por %p67, %p68
      %p70 = scmp.ne.s32.totalorder %s62, %s64
      %p71 = scmp.eq.s32.totalorder %s21, 3
      %p72 = por %p70, %p71
      %p73 = scmp.ne.s32.totalorder %s64, %s65
      %p74 = scmp.eq.s32.totalorder %s21, 0
      %p75 = por %p73, %p74
      %p76 = scmp.ne.s32.totalorder %s64, %s65
      %p77 = scmp.eq.s32.totalorder %s22, 3
      %p78 = por %p76, %p77
      %p80 = scmp.ne.s32.totalorder %s65, %s79
      %p81 = scmp.eq.s32.totalorder %s22, 0
      %p82 = por %p80, %p81
      %s83 = ssub.s32 %s23, %s35
      %s84 = ssub.s32 %s24, %s31
      %s85 = sor.u32 %s83, %s84
      %p86 = scmp.eq.s32.totalorder %s85, 0
      %s88 = sadd.s32 %s87, 1
      %s89 = scalar_select %p86, %s87, %s88
      %p92 = pneg %p86
      %p93 = scmp.eq.s32.totalorder %s16, 3
      %p94 = por %p92, %p93
      %p95 = scmp.ne.s32.totalorder %s87, %s90
      %p96 = scmp.eq.s32.totalorder %s16, 0
      %p97 = por %p95, %p96
      %p98 = scmp.ne.s32.totalorder %s87, %s90
      %p99 = scmp.eq.s32.totalorder %s21, 3
      %p100 = por %p98, %p99
      %p101 = scmp.ne.s32.totalorder %s90, %s91
      %p102 = scmp.eq.s32.totalorder %s21, 0
      %p103 = por %p101, %p102
      %p104 = scmp.ne.s32.totalorder %s90, %s91
      %p105 = scmp.eq.s32.totalorder %s22, 3
      %p106 = por %p104, %p105
      %p108 = scmp.ne.s32.totalorder %s91, %s107
      %p109 = scmp.eq.s32.totalorder %s22, 0
      %p110 = por %p108, %p109
      %s111 = ssub.s32 %s23, %s35
      %s112 = ssub.s32 %s24, %s31
      %s113 = sor.u32 %s111, %s112
      %p114 = scmp.eq.s32.totalorder %s113, 0
      %s116 = sadd.s32 %s115, 1
      %s117 = scalar_select %p114, %s115, %s116
      %p120 = pneg %p114
      %p121 = scmp.eq.s32.totalorder %s16, 3
      %p122 = por %p120, %p121
      %p123 = scmp.ne.s32.totalorder %s115, %s118
      %p124 = scmp.eq.s32.totalorder %s16, 0
      %p125 = por %p123, %p124
      %p126 = scmp.ne.s32.totalorder %s115, %s118
      %p127 = scmp.eq.s32.totalorder %s21, 3
      %p128 = por %p126, %p127
      %p129 = scmp.ne.s32.totalorder %s118, %s119
      %p130 = scmp.eq.s32.totalorder %s21, 0
      %p131 = por %p129, %p130
      %p132 = scmp.ne.s32.totalorder %s118, %s119
      %p133 = scmp.eq.s32.totalorder %s22, 3
      %p134 = por %p132, %p133
      %p136 = scmp.ne.s32.totalorder %s119, %s135
      %p137 = scmp.eq.s32.totalorder %s22, 0
      %p138 = por %p136, %p137
      %p139 = scmp.le.s32.totalorder 1, %s16
      %p140 = scmp.lt.s32.totalorder %s16, 5
      %p141 = pnand %p139, %p140
      %p142 = pneg %p141
      // Predicated region
      $region9: #{tpu_custom_call.1} parent=5 // pred_check
        _
      $region10: #{tpu_custom_call.1} parent=5 // pred_check_branch
        %144 = sbr.rel (%p141) target = $region12
      $region11: #{tpu_custom_call.1} parent=5 // pred_region
        %s145 = ssub.s32 %s16, 1
        // Predicated region
        $region13: #{tpu_custom_call.1} parent=11 // pred_check
          %p146 = pneg %p75
        $region14: #{tpu_custom_call.1} parent=11 // pred_check_branch
          %148 = sbr.rel (%p146) target = $region16
        $region15: #{tpu_custom_call.1} parent=11 // pred_region
          _
        $region16: #{tpu_custom_call.1} parent=11 // pred_fallthru
          _
      $region12: #{tpu_custom_call.1} parent=5 // pred_fallthru
        _
      %p149 = scmp.lt.s32.totalorder %s16, 4
      // Predicated region
      $region17: #{tpu_custom_call.1} parent=5 // pred_check
        %p150 = pneg %p149
      $region18: #{tpu_custom_call.1} parent=5 // pred_check_branch
        %152 = sbr.rel (%p150) target = $region20
      $region19: #{tpu_custom_call.1} parent=5 // pred_region
        // Predicated region
        $region21: #{tpu_custom_call.1} parent=19 // pred_check
          %p153 = pneg %p48
        $region22: #{tpu_custom_call.1} parent=19 // pred_check_branch
          %155 = sbr.rel (%p153) target = $region24
        $region23: #{tpu_custom_call.1} parent=19 // pred_region
          %p156 = scmp.lt.s32.totalorder %s23, 1
          %s157 = scalar_select %p156, %s23, 1
          %s158 = smul.addr %s157, 54
          %s159 = smul.addr %s158, 8
          %s160 = scalar_lea.vmem %s0, %s159
        $region24: #{tpu_custom_call.1} parent=19 // pred_fallthru
          _
      $region20: #{tpu_custom_call.1} parent=5 // pred_fallthru
        _
      %p161 = scmp.le.s32.totalorder 1, %s16
      %p162 = scmp.lt.s32.totalorder %s16, 5
      %p163 = pnand %p161, %p162
      %p164 = pneg %p163
      // Predicated region
      $region25: #{tpu_custom_call.1} parent=5 // pred_check
        _
      $region26: #{tpu_custom_call.1} parent=5 // pred_check_branch
        %166 = sbr.rel (%p163) target = $region28
      $region27: #{tpu_custom_call.1} parent=5 // pred_region
        %s167 = ssub.s32 %s16, 1
        %p168 = scmp.lt.s32.totalorder %s25, 1
        %s169 = scalar_select %p168, %s25, 1
        %s170 = smul.addr %s169, 54
        %s171 = smul.addr %s170, 8
        %s172 = scalar_lea.vmem %s0, %s171
        %p173 = pneg %p54
        %p174 = pneg %p51
        %p175 = pneg %p75
        %p176 = pneg %p72
        %p177 = pneg %p103
        %p178 = pneg %p100
        %s179 = sand.u32 %s90, 1
        %s180 = scalar_lea.sflag [#allocation4], %s179
        %s181 = sand.u32 %s90, 1
        %s182 = smul.addr %s181, 128
        %s183 = scalar_lea.vmem [#allocation3], %s182
        %p184 = pneg %p131
        %p185 = pneg %p128
        %s186 = sand.u32 %s118, 1
        %s187 = scalar_lea.sflag [#allocation6], %s186
        %s188 = sand.u32 %s118, 1
        %s189 = smul.addr %s188, 2
        %s190 = scalar_lea.vmem [#allocation5], %s189
        %p191 = scmp.lt.s32.totalorder %s25, 1
        %s192 = scalar_select %p191, %s25, 1
        %s193 = smul.addr %s192, 54
        %s194 = smul.addr %s193, 8
        %s195 = scalar_lea.vmem %s0, %s194
        %s196 = smul.u32 8, %s26
        %s198 = smul.u32 %s26, 8
        %s199 = smul.u32 %s198, 24
        %s200 = scalar_lea.vmem %s195, %s199
        %v201 = vld [vmem:[%s200] sm:$0xff]
        %v202 = vld [vmem:[%s200 + $0x8] sm:$0xff]
        %v203 = vld [vmem:[%s200 + $0x18] sm:$0xff]
        %v204 = vld [vmem:[%s200 + $0x20] sm:$0xff]
        %v205 = vld [vmem:[%s200 + $0x30] sm:$0xff]
        %v206 = vld [vmem:[%s200 + $0x38] sm:$0xff]
        %v207 = vld [vmem:[%s200 + $0x48] sm:$0xff]
        %v208 = vld [vmem:[%s200 + $0x50] sm:$0xff]
        %v209 = vld [vmem:[%s200 + $0x60] sm:$0xff]
        %v210 = vld [vmem:[%s200 + $0x68] sm:$0xff]
        %v211 = vld [vmem:[%s200 + $0x78] sm:$0xff]
        %v212 = vld [vmem:[%s200 + $0x80] sm:$0xff]
        %v213 = vld [vmem:[%s200 + $0x90] sm:$0xff]
        %v214 = vld [vmem:[%s200 + $0x98] sm:$0xff]
        %v215 = vld [vmem:[%s200 + $0xa8] sm:$0xff]
        %v216 = vld [vmem:[%s200 + $0xb0] sm:$0xff]
        %vm217 = vcmask 31744
        %218 = vst.msk [vmem:[#allocation2] sm:$0xff] %vm217, %v201
        %219 = vst.msk [vmem:[#allocation2 + $0x8] sm:$0xff] %vm217, %v202
        %220 = vst.msk [vmem:[#allocation2 + $0x10] sm:$0xff] %vm217, %v203
        %221 = vst.msk [vmem:[#allocation2 + $0x18] sm:$0xff] %vm217, %v204
        %222 = vst.msk [vmem:[#allocation2 + $0x20] sm:$0xff] %vm217, %v205
        %223 = vst.msk [vmem:[#allocation2 + $0x28] sm:$0xff] %vm217, %v206
        %224 = vst.msk [vmem:[#allocation2 + $0x30] sm:$0xff] %vm217, %v207
        %225 = vst.msk [vmem:[#allocation2 + $0x38] sm:$0xff] %vm217, %v208
        %226 = vst.msk [vmem:[#allocation2 + $0x40] sm:$0xff] %vm217, %v209
        %227 = vst.msk [vmem:[#allocation2 + $0x48] sm:$0xff] %vm217, %v210
        %228 = vst.msk [vmem:[#allocation2 + $0x50] sm:$0xff] %vm217, %v211
        %229 = vst.msk [vmem:[#allocation2 + $0x58] sm:$0xff] %vm217, %v212
        %230 = vst.msk [vmem:[#allocation2 + $0x60] sm:$0xff] %vm217, %v213
        %231 = vst.msk [vmem:[#allocation2 + $0x68] sm:$0xff] %vm217, %v214
        %232 = vst.msk [vmem:[#allocation2 + $0x70] sm:$0xff] %vm217, %v215
        %233 = vst.msk [vmem:[#allocation2 + $0x78] sm:$0xff] %vm217, %v216
        %v234 = vld [vmem:[%s200 + $0x1] sm:$0xff]
        %v235 = vld [vmem:[%s200 + $0x9] sm:$0xff]
        %v236 = vld [vmem:[%s200 + $0x19] sm:$0xff]
        %v237 = vld [vmem:[%s200 + $0x21] sm:$0xff]
        %v238 = vld [vmem:[%s200 + $0x31] sm:$0xff]
        %v239 = vld [vmem:[%s200 + $0x39] sm:$0xff]
        %v240 = vld [vmem:[%s200 + $0x49] sm:$0xff]
        %v241 = vld [vmem:[%s200 + $0x51] sm:$0xff]
        %v242 = vld [vmem:[%s200 + $0x61] sm:$0xff]
        %v243 = vld [vmem:[%s200 + $0x69] sm:$0xff]
        %v244 = vld [vmem:[%s200 + $0x79] sm:$0xff]
        %v245 = vld [vmem:[%s200 + $0x81] sm:$0xff]
        %v246 = vld [vmem:[%s200 + $0x91] sm:$0xff]
        %v247 = vld [vmem:[%s200 + $0x99] sm:$0xff]
        %v248 = vld [vmem:[%s200 + $0xa9] sm:$0xff]
        %v249 = vld [vmem:[%s200 + $0xb1] sm:$0xff]
        %266 = vrot.lane.b32.xlu0 %v234, 4
        %v267 = vpop.permute.xlu0 %266
        %268 = vrot.lane.b32.xlu0 %v235, 4
        %v269 = vpop.permute.xlu0 %268
        %270 = vrot.lane.b32.xlu0 %v236, 4
        %v271 = vpop.permute.xlu0 %270
        %272 = vrot.lane.b32.xlu0 %v237, 4
        %v273 = vpop.permute.xlu0 %272
        %274 = vrot.lane.b32.xlu0 %v238, 4
        %v275 = vpop.permute.xlu0 %274
        %276 = vrot.lane.b32.xlu0 %v239, 4
        %v277 = vpop.permute.xlu0 %276
        %278 = vrot.lane.b32.xlu0 %v240, 4
        %v279 = vpop.permute.xlu0 %278
        %280 = vrot.lane.b32.xlu0 %v241, 4
        %v281 = vpop.permute.xlu0 %280
        %282 = vrot.lane.b32.xlu0 %v242, 4
        %v283 = vpop.permute.xlu0 %282
        %284 = vrot.lane.b32.xlu0 %v243, 4
        %v285 = vpop.permute.xlu0 %284
        %286 = vrot.lane.b32.xlu0 %v244, 4
        %v287 = vpop.permute.xlu0 %286
        %288 = vrot.lane.b32.xlu0 %v245, 4
        %v289 = vpop.permute.xlu0 %288
        %290 = vrot.lane.b32.xlu0 %v246, 4
        %v291 = vpop.permute.xlu0 %290
        %292 = vrot.lane.b32.xlu0 %v247, 4
        %v293 = vpop.permute.xlu0 %292
        %294 = vrot.lane.b32.xlu0 %v248, 4
        %v295 = vpop.permute.xlu0 %294
        %296 = vrot.lane.b32.xlu0 %v249, 4
        %v297 = vpop.permute.xlu0 %296
        %vm314 = vcmask 64544
        %315 = vst.msk [vmem:[#allocation2] sm:$0xff] %vm314, %v267
        %316 = vst.msk [vmem:[#allocation2 + $0x8] sm:$0xff] %vm314, %v269
        %317 = vst.msk [vmem:[#allocation2 + $0x10] sm:$0xff] %vm314, %v271
        %318 = vst.msk [vmem:[#allocation2 + $0x18] sm:$0xff] %vm314, %v273
        %319 = vst.msk [vmem:[#allocation2 + $0x20] sm:$0xff] %vm314, %v275
        %320 = vst.msk [vmem:[#allocation2 + $0x28] sm:$0xff] %vm314, %v277
        %321 = vst.msk [vmem:[#allocation2 + $0x30] sm:$0xff] %vm314, %v279
        %322 = vst.msk [vmem:[#allocation2 + $0x38] sm:$0xff] %vm314, %v281
        %323 = vst.msk [vmem:[#allocation2 + $0x40] sm:$0xff] %vm314, %v283
        %324 = vst.msk [vmem:[#allocation2 + $0x48] sm:$0xff] %vm314, %v285
        %325 = vst.msk [vmem:[#allocation2 + $0x50] sm:$0xff] %vm314, %v287
        %326 = vst.msk [vmem:[#allocation2 + $0x58] sm:$0xff] %vm314, %v289
        %327 = vst.msk [vmem:[#allocation2 + $0x60] sm:$0xff] %vm314, %v291
        %328 = vst.msk [vmem:[#allocation2 + $0x68] sm:$0xff] %vm314, %v293
        %329 = vst.msk [vmem:[#allocation2 + $0x70] sm:$0xff] %vm314, %v295
        %330 = vst.msk [vmem:[#allocation2 + $0x78] sm:$0xff] %vm314, %v297
        %v331 = vld [vmem:[%s200 + $0x2] sm:$0xff]
        %v332 = vld [vmem:[%s200 + $0xa] sm:$0xff]
        %v333 = vld [vmem:[%s200 + $0x1a] sm:$0xff]
        %v334 = vld [vmem:[%s200 + $0x22] sm:$0xff]
        %v335 = vld [vmem:[%s200 + $0x32] sm:$0xff]
        %v336 = vld [vmem:[%s200 + $0x3a] sm:$0xff]
        %v337 = vld [vmem:[%s200 + $0x4a] sm:$0xff]
        %v338 = vld [vmem:[%s200 + $0x52] sm:$0xff]
        %v339 = vld [vmem:[%s200 + $0x62] sm:$0xff]
        %v340 = vld [vmem:[%s200 + $0x6a] sm:$0xff]
        %v341 = vld [vmem:[%s200 + $0x7a] sm:$0xff]
        %v342 = vld [vmem:[%s200 + $0x82] sm:$0xff]
        %v343 = vld [vmem:[%s200 + $0x92] sm:$0xff]
        %v344 = vld [vmem:[%s200 + $0x9a] sm:$0xff]
        %v345 = vld [vmem:[%s200 + $0xaa] sm:$0xff]
        %v346 = vld [vmem:[%s200 + $0xb2] sm:$0xff]
        %363 = vrot.lane.b32.xlu0 %v331, 8
        %v364 = vpop.permute.xlu0 %363
        %365 = vrot.lane.b32.xlu0 %v332, 8
        %v366 = vpop.permute.xlu0 %365
        %367 = vrot.lane.b32.xlu0 %v333, 8
        %v368 = vpop.permute.xlu0 %367
        %369 = vrot.lane.b32.xlu0 %v334, 8
        %v370 = vpop.permute.xlu0 %369
        %371 = vrot.lane.b32.xlu0 %v335, 8
        %v372 = vpop.permute.xlu0 %371
        %373 = vrot.lane.b32.xlu0 %v336, 8
        %v374 = vpop.permute.xlu0 %373
        %375 = vrot.lane.b32.xlu0 %v337, 8
        %v376 = vpop.permute.xlu0 %375
        %377 = vrot.lane.b32.xlu0 %v338, 8
        %v378 = vpop.permute.xlu0 %377
        %379 = vrot.lane.b32.xlu0 %v339, 8
        %v380 = vpop.permute.xlu0 %379
        %381 = vrot.lane.b32.xlu0 %v340, 8
        %v382 = vpop.permute.xlu0 %381
        %383 = vrot.lane.b32.xlu0 %v341, 8
        %v384 = vpop.permute.xlu0 %383
        %385 = vrot.lane.b32.xlu0 %v342, 8
        %v386 = vpop.permute.xlu0 %385
        %387 = vrot.lane.b32.xlu0 %v343, 8
        %v388 = vpop.permute.xlu0 %387
        %389 = vrot.lane.b32.xlu0 %v344, 8
        %v390 = vpop.permute.xlu0 %389
        %391 = vrot.lane.b32.xlu0 %v345, 8
        %v392 = vpop.permute.xlu0 %391
        %393 = vrot.lane.b32.xlu0 %v346, 8
        %v394 = vpop.permute.xlu0 %393
        %vm411 = vcmask 97344
        %412 = vst.msk [vmem:[#allocation2] sm:$0xff] %vm411, %v364
        %413 = vst.msk [vmem:[#allocation2 + $0x8] sm:$0xff] %vm411, %v366
        %414 = vst.msk [vmem:[#allocation2 + $0x10] sm:$0xff] %vm411, %v368
        %415 = vst.msk [vmem:[#allocation2 + $0x18] sm:$0xff] %vm411, %v370
        %416 = vst.msk [vmem:[#allocation2 + $0x20] sm:$0xff] %vm411, %v372
        %417 = vst.msk [vmem:[#allocation2 + $0x28] sm:$0xff] %vm411, %v374
        %418 = vst.msk [vmem:[#allocation2 + $0x30] sm:$0xff] %vm411, %v376
        %419 = vst.msk [vmem:[#allocation2 + $0x38] sm:$0xff] %vm411, %v378
        %420 = vst.msk [vmem:[#allocation2 + $0x40] sm:$0xff] %vm411, %v380
        %421 = vst.msk [vmem:[#allocation2 + $0x48] sm:$0xff] %vm411, %v382
        %422 = vst.msk [vmem:[#allocation2 + $0x50] sm:$0xff] %vm411, %v384
        %423 = vst.msk [vmem:[#allocation2 + $0x58] sm:$0xff] %vm411, %v386
        %424 = vst.msk [vmem:[#allocation2 + $0x60] sm:$0xff] %vm411, %v388
        %425 = vst.msk [vmem:[#allocation2 + $0x68] sm:$0xff] %vm411, %v390
        %426 = vst.msk [vmem:[#allocation2 + $0x70] sm:$0xff] %vm411, %v392
        %427 = vst.msk [vmem:[#allocation2 + $0x78] sm:$0xff] %vm411, %v394
        %s428 = sadd.s32 %s198, 1
        %s429 = smul.u32 %s428, 24
        %s430 = scalar_lea.vmem %s195, %s429
        %v431 = vld [vmem:[%s430] sm:$0xff]
        %v432 = vld [vmem:[%s430 + $0x8] sm:$0xff]
        %v433 = vld [vmem:[%s430 + $0x18] sm:$0xff]
        %v434 = vld [vmem:[%s430 + $0x20] sm:$0xff]
        %v435 = vld [vmem:[%s430 + $0x30] sm:$0xff]
        %v436 = vld [vmem:[%s430 + $0x38] sm:$0xff]
        %v437 = vld [vmem:[%s430 + $0x48] sm:$0xff]
        %v438 = vld [vmem:[%s430 + $0x50] sm:$0xff]
        %v439 = vld [vmem:[%s430 + $0x60] sm:$0xff]
        %v440 = vld [vmem:[%s430 + $0x68] sm:$0xff]
        %v441 = vld [vmem:[%s430 + $0x78] sm:$0xff]
        %v442 = vld [vmem:[%s430 + $0x80] sm:$0xff]
        %v443 = vld [vmem:[%s430 + $0x90] sm:$0xff]
        %v444 = vld [vmem:[%s430 + $0x98] sm:$0xff]
        %v445 = vld [vmem:[%s430 + $0xa8] sm:$0xff]
        %v446 = vld [vmem:[%s430 + $0xb0] sm:$0xff]
        %463 = vrot.lane.b32.xlu0 %v431, 12
        %v464 = vpop.permute.xlu0 %463
        %465 = vrot.lane.b32.xlu0 %v432, 12
        %v466 = vpop.permute.xlu0 %465
        %467 = vrot.lane.b32.xlu0 %v433, 12
        %v468 = vpop.permute.xlu0 %467
        %469 = vrot.lane.b32.xlu0 %v434, 12
        %v470 = vpop.permute.xlu0 %469
        %471 = vrot.lane.b32.xlu0 %v435, 12
        %v472 = vpop.permute.xlu0 %471
        %473 = vrot.lane.b32.xlu0 %v436, 12
        %v474 = vpop.permute.xlu0 %473
        %475 = vrot.lane.b32.xlu0 %v437, 12
        %v476 = vpop.permute.xlu0 %475
        %477 = vrot.lane.b32.xlu0 %v438, 12
        %v478 = vpop.permute.xlu0 %477
        %479 = vrot.lane.b32.xlu0 %v439, 12
        %v480 = vpop.permute.xlu0 %479
        %481 = vrot.lane.b32.xlu0 %v440, 12
        %v482 = vpop.permute.xlu0 %481
        %483 = vrot.lane.b32.xlu0 %v441, 12
        %v484 = vpop.permute.xlu0 %483
        %485 = vrot.lane.b32.xlu0 %v442, 12
        %v486 = vpop.permute.xlu0 %485
        %487 = vrot.lane.b32.xlu0 %v443, 12
        %v488 = vpop.permute.xlu0 %487
        %489 = vrot.lane.b32.xlu0 %v444, 12
        %v490 = vpop.permute.xlu0 %489
        %491 = vrot.lane.b32.xlu0 %v445, 12
        %v492 = vpop.permute.xlu0 %491
        %493 = vrot.lane.b32.xlu0 %v446, 12
        %v494 = vpop.permute.xlu0 %493
        %vm511 = vcmask 130144
        %512 = vst.msk [vmem:[#allocation2] sm:$0xff] %vm511, %v464
        %513 = vst.msk [vmem:[#allocation2 + $0x8] sm:$0xff] %vm511, %v466
        %514 = vst.msk [vmem:[#allocation2 + $0x10] sm:$0xff] %vm511, %v468
        %515 = vst.msk [vmem:[#allocation2 + $0x18] sm:$0xff] %vm511, %v470
        %516 = vst.msk [vmem:[#allocation2 + $0x20] sm:$0xff] %vm511, %v472
        %517 = vst.msk [vmem:[#allocation2 + $0x28] sm:$0xff] %vm511, %v474
        %518 = vst.msk [vmem:[#allocation2 + $0x30] sm:$0xff] %vm511, %v476
        %519 = vst.msk [vmem:[#allocation2 + $0x38] sm:$0xff] %vm511, %v478
        %520 = vst.msk [vmem:[#allocation2 + $0x40] sm:$0xff] %vm511, %v480
        %521 = vst.msk [vmem:[#allocation2 + $0x48] sm:$0xff] %vm511, %v482
        %522 = vst.msk [vmem:[#allocation2 + $0x50] sm:$0xff] %vm511, %v484
        %523 = vst.msk [vmem:[#allocation2 + $0x58] sm:$0xff] %vm511, %v486
        %524 = vst.msk [vmem:[#allocation2 + $0x60] sm:$0xff] %vm511, %v488
        %525 = vst.msk [vmem:[#allocation2 + $0x68] sm:$0xff] %vm511, %v490
        %526 = vst.msk [vmem:[#allocation2 + $0x70] sm:$0xff] %vm511, %v492
        %527 = vst.msk [vmem:[#allocation2 + $0x78] sm:$0xff] %vm511, %v494
        %v528 = vld [vmem:[%s430 + $0x1] sm:$0xff]
        %v529 = vld [vmem:[%s430 + $0x9] sm:$0xff]
        %v530 = vld [vmem:[%s430 + $0x19] sm:$0xff]
        %v531 = vld [vmem:[%s430 + $0x21] sm:$0xff]
        %v532 = vld [vmem:[%s430 + $0x31] sm:$0xff]
        %v533 = vld [vmem:[%s430 + $0x39] sm:$0xff]
        %v534 = vld [vmem:[%s430 + $0x49] sm:$0xff]
        %v535 = vld [vmem:[%s430 + $0x51] sm:$0xff]
        %v536 = vld [vmem:[%s430 + $0x61] sm:$0xff]
        %v537 = vld [vmem:[%s430 + $0x69] sm:$0xff]
        %v538 = vld [vmem:[%s430 + $0x79] sm:$0xff]
        %v539 = vld [vmem:[%s430 + $0x81] sm:$0xff]
        %v540 = vld [vmem:[%s430 + $0x91] sm:$0xff]
        %v541 = vld [vmem:[%s430 + $0x99] sm:$0xff]
        %v542 = vld [vmem:[%s430 + $0xa9] sm:$0xff]
        %v543 = vld [vmem:[%s430 + $0xb1] sm:$0xff]
        %560 = vrot.lane.b32.xlu0 %v528, 16
        %v561 = vpop.permute.xlu0 %560
        %562 = vrot.lane.b32.xlu0 %v529, 16
        %v563 = vpop.permute.xlu0 %562
        %564 = vrot.lane.b32.xlu0 %v530, 16
        %v565 = vpop.permute.xlu0 %564
        %566 = vrot.lane.b32.xlu0 %v531, 16
        %v567 = vpop.permute.xlu0 %566
        %568 = vrot.lane.b32.xlu0 %v532, 16
        %v569 = vpop.permute.xlu0 %568
        %570 = vrot.lane.b32.xlu0 %v533, 16
        %v571 = vpop.permute.xlu0 %570
        %572 = vrot.lane.b32.xlu0 %v534, 16
        %v573 = vpop.permute.xlu0 %572
        %574 = vrot.lane.b32.xlu0 %v535, 16
        %v575 = vpop.permute.xlu0 %574
        %576 = vrot.lane.b32.xlu0 %v536, 16
        %v577 = vpop.permute.xlu0 %576
        %578 = vrot.lane.b32.xlu0 %v537, 16
        %v579 = vpop.permute.xlu0 %578
        %580 = vrot.lane.b32.xlu0 %v538, 16
        %v581 = vpop.permute.xlu0 %580
        %582 = vrot.lane.b32.xlu0 %v539, 16
        %v583 = vpop.permute.xlu0 %582
        %584 = vrot.lane.b32.xlu0 %v540, 16
        %v585 = vpop.permute.xlu0 %584
        %586 = vrot.lane.b32.xlu0 %v541, 16
        %v587 = vpop.permute.xlu0 %586
        %588 = vrot.lane.b32.xlu0 %v542, 16
        %v589 = vpop.permute.xlu0 %588
        %590 = vrot.lane.b32.xlu0 %v543, 16
        %v591 = vpop.permute.xlu0 %590
        %vm608 = vcmask 162944
        %609 = vst.msk [vmem:[#allocation2] sm:$0xff] %vm608, %v561
        %610 = vst.msk [vmem:[#allocation2 + $0x8] sm:$0xff] %vm608, %v563
        %611 = vst.msk [vmem:[#allocation2 + $0x10] sm:$0xff] %vm608, %v565
        %612 = vst.msk [vmem:[#allocation2 + $0x18] sm:$0xff] %vm608, %v567
        %613 = vst.msk [vmem:[#allocation2 + $0x20] sm:$0xff] %vm608, %v569
        %614 = vst.msk [vmem:[#allocation2 + $0x28] sm:$0xff] %vm608, %v571
        %615 = vst.msk [vmem:[#allocation2 + $0x30] sm:$0xff] %vm608, %v573
        %616 = vst.msk [vmem:[#allocation2 + $0x38] sm:$0xff] %vm608, %v575
        %617 = vst.msk [vmem:[#allocation2 + $0x40] sm:$0xff] %vm608, %v577
        %618 = vst.msk [vmem:[#allocation2 + $0x48] sm:$0xff] %vm608, %v579
        %619 = vst.msk [vmem:[#allocation2 + $0x50] sm:$0xff] %vm608, %v581
        %620 = vst.msk [vmem:[#allocation2 + $0x58] sm:$0xff] %vm608, %v583
        %621 = vst.msk [vmem:[#allocation2 + $0x60] sm:$0xff] %vm608, %v585
        %622 = vst.msk [vmem:[#allocation2 + $0x68] sm:$0xff] %vm608, %v587
        %623 = vst.msk [vmem:[#allocation2 + $0x70] sm:$0xff] %vm608, %v589
        %624 = vst.msk [vmem:[#allocation2 + $0x78] sm:$0xff] %vm608, %v591
        %v625 = vld [vmem:[%s430 + $0x2] sm:$0xff]
        %v626 = vld [vmem:[%s430 + $0xa] sm:$0xff]
        %v627 = vld [vmem:[%s430 + $0x1a] sm:$0xff]
        %v628 = vld [vmem:[%s430 + $0x22] sm:$0xff]
        %v629 = vld [vmem:[%s430 + $0x32] sm:$0xff]
        %v630 = vld [vmem:[%s430 + $0x3a] sm:$0xff]
        %v631 = vld [vmem:[%s430 + $0x4a] sm:$0xff]
        %v632 = vld [vmem:[%s430 + $0x52] sm:$0xff]
        %v633 = vld [vmem:[%s430 + $0x62] sm:$0xff]
        %v634 = vld [vmem:[%s430 + $0x6a] sm:$0xff]
        %v635 = vld [vmem:[%s430 + $0x7a] sm:$0xff]
        %v636 = vld [vmem:[%s430 + $0x82] sm:$0xff]
        %v637 = vld [vmem:[%s430 + $0x92] sm:$0xff]
        %v638 = vld [vmem:[%s430 + $0x9a] sm:$0xff]
        %v639 = vld [vmem:[%s430 + $0xaa] sm:$0xff]
        %v640 = vld [vmem:[%s430 + $0xb2] sm:$0xff]
        %657 = vrot.lane.b32.xlu0 %v625, 20
        %v658 = vpop.permute.xlu0 %657
        %659 = vrot.lane.b32.xlu0 %v626, 20
        %v660 = vpop.permute.xlu0 %659
        %661 = vrot.lane.b32.xlu0 %v627, 20
        %v662 = vpop.permute.xlu0 %661
        %663 = vrot.lane.b32.xlu0 %v628, 20
        %v664 = vpop.permute.xlu0 %663
        %665 = vrot.lane.b32.xlu0 %v629, 20
        %v666 = vpop.permute.xlu0 %665
        %667 = vrot.lane.b32.xlu0 %v630, 20
        %v668 = vpop.permute.xlu0 %667
        %669 = vrot.lane.b32.xlu0 %v631, 20
        %v670 = vpop.permute.xlu0 %669
        %671 = vrot.lane.b32.xlu0 %v632, 20
        %v672 = vpop.permute.xlu0 %671
        %673 = vrot.lane.b32.xlu0 %v633, 20
        %v674 = vpop.permute.xlu0 %673
        %675 = vrot.lane.b32.xlu0 %v634, 20
        %v676 = vpop.permute.xlu0 %675
        %677 = vrot.lane.b32.xlu0 %v635, 20
        %v678 = vpop.permute.xlu0 %677
        %679 = vrot.lane.b32.xlu0 %v636, 20
        %v680 = vpop.permute.xlu0 %679
        %681 = vrot.lane.b32.xlu0 %v637, 20
        %v682 = vpop.permute.xlu0 %681
        %683 = vrot.lane.b32.xlu0 %v638, 20
        %v684 = vpop.permute.xlu0 %683
        %685 = vrot.lane.b32.xlu0 %v639, 20
        %v686 = vpop.permute.xlu0 %685
        %687 = vrot.lane.b32.xlu0 %v640, 20
        %v688 = vpop.permute.xlu0 %687
        %vm705 = vcmask 195744
        %706 = vst.msk [vmem:[#allocation2] sm:$0xff] %vm705, %v658
        %707 = vst.msk [vmem:[#allocation2 + $0x8] sm:$0xff] %vm705, %v660
        %708 = vst.msk [vmem:[#allocation2 + $0x10] sm:$0xff] %vm705, %v662
        %709 = vst.msk [vmem:[#allocation2 + $0x18] sm:$0xff] %vm705, %v664
        %710 = vst.msk [vmem:[#allocation2 + $0x20] sm:$0xff] %vm705, %v666
        %711 = vst.msk [vmem:[#allocation2 + $0x28] sm:$0xff] %vm705, %v668
        %712 = vst.msk [vmem:[#allocation2 + $0x30] sm:$0xff] %vm705, %v670
        %713 = vst.msk [vmem:[#allocation2 + $0x38] sm:$0xff] %vm705, %v672
        %714 = vst.msk [vmem:[#allocation2 + $0x40] sm:$0xff] %vm705, %v674
        %715 = vst.msk [vmem:[#allocation2 + $0x48] sm:$0xff] %vm705, %v676
        %716 = vst.msk [vmem:[#allocation2 + $0x50] sm:$0xff] %vm705, %v678
        %717 = vst.msk [vmem:[#allocation2 + $0x58] sm:$0xff] %vm705, %v680
        %718 = vst.msk [vmem:[#allocation2 + $0x60] sm:$0xff] %vm705, %v682
        %719 = vst.msk [vmem:[#allocation2 + $0x68] sm:$0xff] %vm705, %v684
        %720 = vst.msk [vmem:[#allocation2 + $0x70] sm:$0xff] %vm705, %v686
        %721 = vst.msk [vmem:[#allocation2 + $0x78] sm:$0xff] %vm705, %v688
        %s722 = sadd.s32 %s198, 2
        %s723 = smul.u32 %s722, 24
        %s724 = scalar_lea.vmem %s195, %s723
        %v725 = vld [vmem:[%s724] sm:$0xff]
        %v726 = vld [vmem:[%s724 + $0x8] sm:$0xff]
        %v727 = vld [vmem:[%s724 + $0x18] sm:$0xff]
        %v728 = vld [vmem:[%s724 + $0x20] sm:$0xff]
        %v729 = vld [vmem:[%s724 + $0x30] sm:$0xff]
        %v730 = vld [vmem:[%s724 + $0x38] sm:$0xff]
        %v731 = vld [vmem:[%s724 + $0x48] sm:$0xff]
        %v732 = vld [vmem:[%s724 + $0x50] sm:$0xff]
        %v733 = vld [vmem:[%s724 + $0x60] sm:$0xff]
        %v734 = vld [vmem:[%s724 + $0x68] sm:$0xff]
        %v735 = vld [vmem:[%s724 + $0x78] sm:$0xff]
        %v736 = vld [vmem:[%s724 + $0x80] sm:$0xff]
        %v737 = vld [vmem:[%s724 + $0x90] sm:$0xff]
        %v738 = vld [vmem:[%s724 + $0x98] sm:$0xff]
        %v739 = vld [vmem:[%s724 + $0xa8] sm:$0xff]
        %v740 = vld [vmem:[%s724 + $0xb0] sm:$0xff]
        %757 = vrot.lane.b32.xlu0 %v725, 24
        %v758 = vpop.permute.xlu0 %757
        %759 = vrot.lane.b32.xlu0 %v726, 24
        %v760 = vpop.permute.xlu0 %759
        %761 = vrot.lane.b32.xlu0 %v727, 24
        %v762 = vpop.permute.xlu0 %761
        %763 = vrot.lane.b32.xlu0 %v728, 24
        %v764 = vpop.permute.xlu0 %763
        %765 = vrot.lane.b32.xlu0 %v729, 24
        %v766 = vpop.permute.xlu0 %765
        %767 = vrot.lane.b32.xlu0 %v730, 24
        %v768 = vpop.permute.xlu0 %767
        %769 = vrot.lane.b32.xlu0 %v731, 24
        %v770 = vpop.permute.xlu0 %769
        %771 = vrot.lane.b32.xlu0 %v732, 24
        %v772 = vpop.permute.xlu0 %771
        %773 = vrot.lane.b32.xlu0 %v733, 24
        %v774 = vpop.permute.xlu0 %773
        %775 = vrot.lane.b32.xlu0 %v734, 24
        %v776 = vpop.permute.xlu0 %775
        %777 = vrot.lane.b32.xlu0 %v735, 24
        %v778 = vpop.permute.xlu0 %777
        %779 = vrot.lane.b32.xlu0 %v736, 24
        %v780 = vpop.permute.xlu0 %779
        %781 = vrot.lane.b32.xlu0 %v737, 24
        %v782 = vpop.permute.xlu0 %781
        %783 = vrot.lane.b32.xlu0 %v738, 24
        %v784 = vpop.permute.xlu0 %783
        %785 = vrot.lane.b32.xlu0 %v739, 24
        %v786 = vpop.permute.xlu0 %785
        %787 = vrot.lane.b32.xlu0 %v740, 24
        %v788 = vpop.permute.xlu0 %787
        %vm805 = vcmask 228544
        %806 = vst.msk [vmem:[#allocation2] sm:$0xff] %vm805, %v758
        %807 = vst.msk [vmem:[#allocation2 + $0x8] sm:$0xff] %vm805, %v760
        %808 = vst.msk [vmem:[#allocation2 + $0x10] sm:$0xff] %vm805, %v762
        %809 = vst.msk [vmem:[#allocation2 + $0x18] sm:$0xff] %vm805, %v764
        %810 = vst.msk [vmem:[#allocation2 + $0x20] sm:$0xff] %vm805, %v766
        %811 = vst.msk [vmem:[#allocation2 + $0x28] sm:$0xff] %vm805, %v768
        %812 = vst.msk [vmem:[#allocation2 + $0x30] sm:$0xff] %vm805, %v770
        %813 = vst.msk [vmem:[#allocation2 + $0x38] sm:$0xff] %vm805, %v772
        %814 = vst.msk [vmem:[#allocation2 + $0x40] sm:$0xff] %vm805, %v774
        %815 = vst.msk [vmem:[#allocation2 + $0x48] sm:$0xff] %vm805, %v776
        %816 = vst.msk [vmem:[#allocation2 + $0x50] sm:$0xff] %vm805, %v778
        %817 = vst.msk [vmem:[#allocation2 + $0x58] sm:$0xff] %vm805, %v780
        %818 = vst.msk [vmem:[#allocation2 + $0x60] sm:$0xff] %vm805, %v782
        %819 = vst.msk [vmem:[#allocation2 + $0x68] sm:$0xff] %vm805, %v784
        %820 = vst.msk [vmem:[#allocation2 + $0x70] sm:$0xff] %vm805, %v786
        %821 = vst.msk [vmem:[#allocation2 + $0x78] sm:$0xff] %vm805, %v788
        %v822 = vld [vmem:[%s724 + $0x1] sm:$0xff]
        %v823 = vld [vmem:[%s724 + $0x9] sm:$0xff]
        %v824 = vld [vmem:[%s724 + $0x19] sm:$0xff]
        %v825 = vld [vmem:[%s724 + $0x21] sm:$0xff]
        %v826 = vld [vmem:[%s724 + $0x31] sm:$0xff]
        %v827 = vld [vmem:[%s724 + $0x39] sm:$0xff]
        %v828 = vld [vmem:[%s724 + $0x49] sm:$0xff]
        %v829 = vld [vmem:[%s724 + $0x51] sm:$0xff]
        %v830 = vld [vmem:[%s724 + $0x61] sm:$0xff]
        %v831 = vld [vmem:[%s724 + $0x69] sm:$0xff]
        %v832 = vld [vmem:[%s724 + $0x79] sm:$0xff]
        %v833 = vld [vmem:[%s724 + $0x81] sm:$0xff]
        %v834 = vld [vmem:[%s724 + $0x91] sm:$0xff]
        %v835 = vld [vmem:[%s724 + $0x99] sm:$0xff]
        %v836 = vld [vmem:[%s724 + $0xa9] sm:$0xff]
        %v837 = vld [vmem:[%s724 + $0xb1] sm:$0xff]
        %854 = vrot.lane.b32.xlu0 %v822, 28
        %v855 = vpop.permute.xlu0 %854
        %856 = vrot.lane.b32.xlu0 %v823, 28
        %v857 = vpop.permute.xlu0 %856
        %858 = vrot.lane.b32.xlu0 %v824, 28
        %v859 = vpop.permute.xlu0 %858
        %860 = vrot.lane.b32.xlu0 %v825, 28
        %v861 = vpop.permute.xlu0 %860
        %862 = vrot.lane.b32.xlu0 %v826, 28
        %v863 = vpop.permute.xlu0 %862
        %864 = vrot.lane.b32.xlu0 %v827, 28
        %v865 = vpop.permute.xlu0 %864
        %866 = vrot.lane.b32.xlu0 %v828, 28
        %v867 = vpop.permute.xlu0 %866
        %868 = vrot.lane.b32.xlu0 %v829, 28
        %v869 = vpop.permute.xlu0 %868
        %870 = vrot.lane.b32.xlu0 %v830, 28
        %v871 = vpop.permute.xlu0 %870
        %872 = vrot.lane.b32.xlu0 %v831, 28
        %v873 = vpop.permute.xlu0 %872
        %874 = vrot.lane.b32.xlu0 %v832, 28
        %v875 = vpop.permute.xlu0 %874
        %876 = vrot.lane.b32.xlu0 %v833, 28
        %v877 = vpop.permute.xlu0 %876
        %878 = vrot.lane.b32.xlu0 %v834, 28
        %v879 = vpop.permute.xlu0 %878
        %880 = vrot.lane.b32.xlu0 %v835, 28
        %v881 = vpop.permute.xlu0 %880
        %882 = vrot.lane.b32.xlu0 %v836, 28
        %v883 = vpop.permute.xlu0 %882
        %884 = vrot.lane.b32.xlu0 %v837, 28
        %v885 = vpop.permute.xlu0 %884
        %vm902 = vcmask 261344
        %903 = vst.msk [vmem:[#allocation2] sm:$0xff] %vm902, %v855
        %904 = vst.msk [vmem:[#allocation2 + $0x8] sm:$0xff] %vm902, %v857
        %905 = vst.msk [vmem:[#allocation2 + $0x10] sm:$0xff] %vm902, %v859
        %906 = vst.msk [vmem:[#allocation2 + $0x18] sm:$0xff] %vm902, %v861
        %907 = vst.msk [vmem:[#allocation2 + $0x20] sm:$0xff] %vm902, %v863
        %908 = vst.msk [vmem:[#allocation2 + $0x28] sm:$0xff] %vm902, %v865
        %909 = vst.msk [vmem:[#allocation2 + $0x30] sm:$0xff] %vm902, %v867
        %910 = vst.msk [vmem:[#allocation2 + $0x38] sm:$0xff] %vm902, %v869
        %911 = vst.msk [vmem:[#allocation2 + $0x40] sm:$0xff] %vm902, %v871
        %912 = vst.msk [vmem:[#allocation2 + $0x48] sm:$0xff] %vm902, %v873
        %913 = vst.msk [vmem:[#allocation2 + $0x50] sm:$0xff] %vm902, %v875
        %914 = vst.msk [vmem:[#allocation2 + $0x58] sm:$0xff] %vm902, %v877
        %915 = vst.msk [vmem:[#allocation2 + $0x60] sm:$0xff] %vm902, %v879
        %916 = vst.msk [vmem:[#allocation2 + $0x68] sm:$0xff] %vm902, %v881
        %917 = vst.msk [vmem:[#allocation2 + $0x70] sm:$0xff] %vm902, %v883
        %918 = vst.msk [vmem:[#allocation2 + $0x78] sm:$0xff] %vm902, %v885
        %v919 = vld [vmem:[%s724 + $0x2] sm:$0xff]
        %v920 = vld [vmem:[%s724 + $0xa] sm:$0xff]
        %v921 = vld [vmem:[%s724 + $0x1a] sm:$0xff]
        %v922 = vld [vmem:[%s724 + $0x22] sm:$0xff]
        %v923 = vld [vmem:[%s724 + $0x32] sm:$0xff]
        %v924 = vld [vmem:[%s724 + $0x3a] sm:$0xff]
        %v925 = vld [vmem:[%s724 + $0x4a] sm:$0xff]
        %v926 = vld [vmem:[%s724 + $0x52] sm:$0xff]
        %v927 = vld [vmem:[%s724 + $0x62] sm:$0xff]
        %v928 = vld [vmem:[%s724 + $0x6a] sm:$0xff]
        %v929 = vld [vmem:[%s724 + $0x7a] sm:$0xff]
        %v930 = vld [vmem:[%s724 + $0x82] sm:$0xff]
        %v931 = vld [vmem:[%s724 + $0x92] sm:$0xff]
        %v932 = vld [vmem:[%s724 + $0x9a] sm:$0xff]
        %v933 = vld [vmem:[%s724 + $0xaa] sm:$0xff]
        %v934 = vld [vmem:[%s724 + $0xb2] sm:$0xff]
        %951 = vrot.lane.b32.xlu0 %v919, 32
        %v952 = vpop.permute.xlu0 %951
        %953 = vrot.lane.b32.xlu0 %v920, 32
        %v954 = vpop.permute.xlu0 %953
        %955 = vrot.lane.b32.xlu0 %v921, 32
        %v956 = vpop.permute.xlu0 %955
        %957 = vrot.lane.b32.xlu0 %v922, 32
        %v958 = vpop.permute.xlu0 %957
        %959 = vrot.lane.b32.xlu0 %v923, 32
        %v960 = vpop.permute.xlu0 %959
        %961 = vrot.lane.b32.xlu0 %v924, 32
        %v962 = vpop.permute.xlu0 %961
        %963 = vrot.lane.b32.xlu0 %v925, 32
        %v964 = vpop.permute.xlu0 %963
        %965 = vrot.lane.b32.xlu0 %v926, 32
        %v966 = vpop.permute.xlu0 %965
        %967 = vrot.lane.b32.xlu0 %v927, 32
        %v968 = vpop.permute.xlu0 %967
        %969 = vrot.lane.b32.xlu0 %v928, 32
        %v970 = vpop.permute.xlu0 %969
        %971 = vrot.lane.b32.xlu0 %v929, 32
        %v972 = vpop.permute.xlu0 %971
        %973 = vrot.lane.b32.xlu0 %v930, 32
        %v974 = vpop.permute.xlu0 %973
        %975 = vrot.lane.b32.xlu0 %v931, 32
        %v976 = vpop.permute.xlu0 %975
        %977 = vrot.lane.b32.xlu0 %v932, 32
        %v978 = vpop.permute.xlu0 %977
        %979 = vrot.lane.b32.xlu0 %v933, 32
        %v980 = vpop.permute.xlu0 %979
        %981 = vrot.lane.b32.xlu0 %v934, 32
        %v982 = vpop.permute.xlu0 %981
        %vm999 = vcmask 294144
        %1000 = vst.msk [vmem:[#allocation2] sm:$0xff] %vm999, %v952
        %1001 = vst.msk [vmem:[#allocation2 + $0x8] sm:$0xff] %vm999, %v954
        %1002 = vst.msk [vmem:[#allocation2 + $0x10] sm:$0xff] %vm999, %v956
        %1003 = vst.msk [vmem:[#allocation2 + $0x18] sm:$0xff] %vm999, %v958
        %1004 = vst.msk [vmem:[#allocation2 + $0x20] sm:$0xff] %vm999, %v960
        %1005 = vst.msk [vmem:[#allocation2 + $0x28] sm:$0xff] %vm999, %v962
        %1006 = vst.msk [vmem:[#allocation2 + $0x30] sm:$0xff] %vm999, %v964
        %1007 = vst.msk [vmem:[#allocation2 + $0x38] sm:$0xff] %vm999, %v966
        %1008 = vst.msk [vmem:[#allocation2 + $0x40] sm:$0xff] %vm999, %v968
        %1009 = vst.msk [vmem:[#allocation2 + $0x48] sm:$0xff] %vm999, %v970
        %1010 = vst.msk [vmem:[#allocation2 + $0x50] sm:$0xff] %vm999, %v972
        %1011 = vst.msk [vmem:[#allocation2 + $0x58] sm:$0xff] %vm999, %v974
        %1012 = vst.msk [vmem:[#allocation2 + $0x60] sm:$0xff] %vm999, %v976
        %1013 = vst.msk [vmem:[#allocation2 + $0x68] sm:$0xff] %vm999, %v978
        %1014 = vst.msk [vmem:[#allocation2 + $0x70] sm:$0xff] %vm999, %v980
        %1015 = vst.msk [vmem:[#allocation2 + $0x78] sm:$0xff] %vm999, %v982
        %v1016 = vld [vmem:[#allocation2] sm:$0xff]
        %v1017 = vld [vmem:[#allocation2 + $0x8] sm:$0xff]
        %v1018 = vld [vmem:[#allocation2 + $0x10] sm:$0xff]
        %v1019 = vld [vmem:[#allocation2 + $0x18] sm:$0xff]
        %v1020 = vld [vmem:[#allocation2 + $0x20] sm:$0xff]
        %v1021 = vld [vmem:[#allocation2 + $0x28] sm:$0xff]
        %v1022 = vld [vmem:[#allocation2 + $0x30] sm:$0xff]
        %v1023 = vld [vmem:[#allocation2 + $0x38] sm:$0xff]
        %v1024 = vld [vmem:[#allocation2 + $0x40] sm:$0xff]
        %v1025 = vld [vmem:[#allocation2 + $0x48] sm:$0xff]
        %v1026 = vld [vmem:[#allocation2 + $0x50] sm:$0xff]
        %v1027 = vld [vmem:[#allocation2 + $0x58] sm:$0xff]
        %v1028 = vld [vmem:[#allocation2 + $0x60] sm:$0xff]
        %v1029 = vld [vmem:[#allocation2 + $0x68] sm:$0xff]
        %v1030 = vld [vmem:[#allocation2 + $0x70] sm:$0xff]
        %v1031 = vld [vmem:[#allocation2 + $0x78] sm:$0xff]
        %v1032 = vpack.c.bf16 %v1017, %v1016
        %v1033 = vpack.c.bf16 %v1019, %v1018
        %v1034 = vpack.c.bf16 %v1021, %v1020
        %v1035 = vpack.c.bf16 %v1023, %v1022
        %v1036 = vpack.c.bf16 %v1025, %v1024
        %v1037 = vpack.c.bf16 %v1027, %v1026
        %v1038 = vpack.c.bf16 %v1029, %v1028
        %v1039 = vpack.c.bf16 %v1031, %v1030
        %v1040 = vld [vmem:[%s1] sm:$0xf]
        %v1041 = vld [vmem:[%s1 + $0x4] sm:$0xf]
        %v1042 = vld [vmem:[%s1 + $0x8] sm:$0xf]
        %v1043 = vld [vmem:[%s1 + $0xc] sm:$0xf]
        %v1044 = vld [vmem:[%s1 + $0x10] sm:$0x3]
        %v1050 = vunpack.c.l.b16 %v1040
        %v1051 = vunpack.c.l.b16 %v1041
        %v1052 = vunpack.c.l.b16 %v1042
        %v1053 = vunpack.c.l.b16 %v1043
        %v1054 = vunpack.c.l.b16 %v1044
        %v1055 = vpack.c.b16 %v1051, %v1050
        %v1056 = vpack.c.b16 %v1053, %v1052
        %v1057 = vpack.c.b16 %v1054, %v1054
        %vm1060 = vcmask 293888
        %v1062 = vsel %vm1060, %v1032, 0
        %v1065 = vsel %vm1060, %v1033, 0
        %v1068 = vsel %vm1060, %v1034, 0
        %v1071 = vsel %vm1060, %v1035, 0
        %v1074 = vsel %vm1060, %v1036, 0
        %v1077 = vsel %vm1060, %v1037, 0
        %v1080 = vsel %vm1060, %v1038, 0
        %v1083 = vsel %vm1060, %v1039, 0
        %vm1085 = vcmask 1041408
        %v1087 = vsel %vm1085, %v1057, 0
        %1089 = vmatprep.subr.bf16.mxu0 0
        %1090 = vmatpush1.bf16.msra.mxu0 0
        %1091 = vmatprep.subr.bf16.mxu0 0
        %1092 = vmatpush1.bf16.msra.mxu0 0
        %1093 = vmatprep.subr.bf16.mxu0 0
        %1094 = vmatpush1.bf16.msra.mxu0 0
        %1095 = vmatprep.subr.bf16.mxu0 0
        %1096 = vmatpush1.bf16.msra.mxu0 0
        %1097 = vmatprep.subr.bf16.mxu0 0
        %1098 = vmatpush1.bf16.msra.mxu0 0
        %1099 = vmatprep.subr.bf16.mxu0 0
        %1100 = vmatpush1.bf16.msra.mxu0 %v1087
        %1101 = vmatprep.subr.bf16.mxu0 0
        %1102 = vmatpush1.bf16.msra.mxu0 %v1056
        %1103 = vmatprep.subr.bf16.mxu0 0
        %1104 = vmatpush1.bf16.msra.mxu0 %v1055
        %1105 = vmatprep.subr.bf16.mxu0 0
        %1106 = vmatpush2.bf16.msra.mxu0 0
        %1107 = vmatprep.subr.bf16.mxu0 0
        %1108 = vmatpush2.bf16.msra.mxu0 0
        %1109 = vmatprep.subr.bf16.mxu0 0
        %1110 = vmatpush2.bf16.msra.mxu0 0
        %1111 = vmatprep.subr.bf16.mxu0 0
        %1112 = vmatpush2.bf16.msra.mxu0 0
        %1113 = vmatprep.subr.bf16.mxu0 0
        %1114 = vmatpush2.bf16.msra.mxu0 0
        %1115 = vmatprep.subr.bf16.mxu0 0
        %1116 = vmatpush2.bf16.msra.mxu0 0
        %1117 = vmatprep.subr.bf16.mxu0 0
        %1118 = vmatpush2.bf16.msra.mxu0 0
        %1119 = vmatprep.subr.bf16.mxu0 0
        %1120 = vmatpush2.bf16.msra.mxu0 0
        %1121 = vmatprep.mubr.bf16.mxu0 0
        %1122 = vmatmul.mubr.bf16.gmra.mxu0 %v1062
        %v1123 = vpop.f32.mrf.mxu0
        %v1124 = vadd.f32 0.0, %v1123
        %v1125 = vpop.f32.mrf.mxu0
        %v1126 = vpop.f32.mrf.mxu0
        %v1127 = vadd.f32 0.0, %v1126
        %v1128 = vpop.f32.mrf.mxu0
        %1129 = vmatprep.mubr.bf16.mxu0 0
        %1130 = vmatmul.mubr.bf16.gmra.mxu0 %v1065
        %v1131 = vpop.f32.mrf.mxu0
        %v1132 = vadd.f32 0.0, %v1131
        %v1133 = vpop.f32.mrf.mxu0
        %v1134 = vpop.f32.mrf.mxu0
        %v1135 = vadd.f32 0.0, %v1134
        %v1136 = vpop.f32.mrf.mxu0
        %1137 = vmatprep.mubr.bf16.mxu0 0
        %1138 = vmatmul.mubr.bf16.gmra.mxu0 %v1068
        %v1139 = vpop.f32.mrf.mxu0
        %v1140 = vadd.f32 0.0, %v1139
        %v1141 = vpop.f32.mrf.mxu0
        %v1142 = vpop.f32.mrf.mxu0
        %v1143 = vadd.f32 0.0, %v1142
        %v1144 = vpop.f32.mrf.mxu0
        %1145 = vmatprep.mubr.bf16.mxu0 0
        %1146 = vmatmul.mubr.bf16.gmra.mxu0 %v1071
        %v1147 = vpop.f32.mrf.mxu0
        %v1148 = vadd.f32 0.0, %v1147
        %v1149 = vpop.f32.mrf.mxu0
        %v1150 = vpop.f32.mrf.mxu0
        %v1151 = vadd.f32 0.0, %v1150
        %v1152 = vpop.f32.mrf.mxu0
        %1153 = vmatprep.mubr.bf16.mxu0 0
        %1154 = vmatmul.mubr.bf16.gmra.mxu0 %v1074
        %v1155 = vpop.f32.mrf.mxu0
        %v1156 = vadd.f32 0.0, %v1155
        %v1157 = vpop.f32.mrf.mxu0
        %v1158 = vpop.f32.mrf.mxu0
        %v1159 = vadd.f32 0.0, %v1158
        %v1160 = vpop.f32.mrf.mxu0
        %1161 = vmatprep.mubr.bf16.mxu0 0
        %1162 = vmatmul.mubr.bf16.gmra.mxu0 %v1077
        %v1163 = vpop.f32.mrf.mxu0
        %v1164 = vadd.f32 0.0, %v1163
        %v1165 = vpop.f32.mrf.mxu0
        %v1166 = vpop.f32.mrf.mxu0
        %v1167 = vadd.f32 0.0, %v1166
        %v1168 = vpop.f32.mrf.mxu0
        %1169 = vmatprep.mubr.bf16.mxu0 0
        %1170 = vmatmul.mubr.bf16.gmra.mxu0 %v1080
        %v1171 = vpop.f32.mrf.mxu0
        %v1172 = vadd.f32 0.0, %v1171
        %v1173 = vpop.f32.mrf.mxu0
        %v1174 = vpop.f32.mrf.mxu0
        %v1175 = vadd.f32 0.0, %v1174
        %v1176 = vpop.f32.mrf.mxu0
        %1177 = vmatprep.mubr.bf16.mxu0 0
        %1178 = vmatmul.mubr.bf16.gmra.mxu0 %v1083
        %v1179 = vpop.f32.mrf.mxu0
        %v1180 = vadd.f32 0.0, %v1179
        %v1181 = vpop.f32.mrf.mxu0
        %v1182 = vpop.f32.mrf.mxu0
        %v1183 = vadd.f32 0.0, %v1182
        %v1184 = vpop.f32.mrf.mxu0
        %1185 = vdwg.mxu0
        %v1186 = vadd.f32 %v1124, %v1127
        %v1187 = vadd.f32 %v1186, %v1132
        %v1188 = vadd.f32 %v1187, %v1135
        %v1189 = vadd.f32 %v1188, %v1140
        %v1190 = vadd.f32 %v1189, %v1143
        %v1191 = vadd.f32 %v1190, %v1148
        %v1192 = vadd.f32 %v1191, %v1151
        %v1193 = vadd.f32 %v1192, %v1156
        %v1194 = vadd.f32 %v1193, %v1159
        %v1195 = vadd.f32 %v1194, %v1164
        %v1196 = vadd.f32 %v1195, %v1167
        %v1197 = vadd.f32 %v1196, %v1172
        %v1198 = vadd.f32 %v1197, %v1175
        %v1199 = vadd.f32 %v1198, %v1180
        %v1200 = vadd.f32 %v1199, %v1183
        %v1201 = vrot.slane %v1200, 4
        %v1202 = vadd.f32 %v1200, %v1201
        %v1203 = vrot.slane %v1202, 2
        %v1204 = vadd.f32 %v1202, %v1203
        %v1205 = vrot.slane %v1204, 1
        %v1206 = vadd.f32 %v1204, %v1205
        %v1207 = vmul.f32 %v1124, %v1124
        %v1208 = vmul.f32 %v1127, %v1127
        %v1209 = vmul.f32 %v1132, %v1132
        %v1210 = vmul.f32 %v1135, %v1135
        %v1211 = vmul.f32 %v1140, %v1140
        %v1212 = vmul.f32 %v1143, %v1143
        %v1213 = vmul.f32 %v1148, %v1148
        %v1214 = vmul.f32 %v1151, %v1151
        %v1215 = vmul.f32 %v1156, %v1156
        %v1216 = vmul.f32 %v1159, %v1159
        %v1217 = vmul.f32 %v1164, %v1164
        %v1218 = vmul.f32 %v1167, %v1167
        %v1219 = vmul.f32 %v1172, %v1172
        %v1220 = vmul.f32 %v1175, %v1175
        %v1221 = vmul.f32 %v1180, %v1180
        %v1222 = vmul.f32 %v1183, %v1183
        %v1223 = vadd.f32 %v1207, %v1208
        %v1224 = vadd.f32 %v1223, %v1209
        %v1225 = vadd.f32 %v1224, %v1210
        %v1226 = vadd.f32 %v1225, %v1211
        %v1227 = vadd.f32 %v1226, %v1212
        %v1228 = vadd.f32 %v1227, %v1213
        %v1229 = vadd.f32 %v1228, %v1214
        %v1230 = vadd.f32 %v1229, %v1215
        %v1231 = vadd.f32 %v1230, %v1216
        %v1232 = vadd.f32 %v1231, %v1217
        %v1233 = vadd.f32 %v1232, %v1218
        %v1234 = vadd.f32 %v1233, %v1219
        %v1235 = vadd.f32 %v1234, %v1220
        %v1236 = vadd.f32 %v1235, %v1221
        %v1237 = vadd.f32 %v1236, %v1222
        %v1238 = vrot.slane %v1237, 4
        %v1239 = vadd.f32 %v1237, %v1238
        %v1240 = vrot.slane %v1239, 2
        %v1241 = vadd.f32 %v1239, %v1240
        %v1242 = vrot.slane %v1241, 1
        %v1243 = vadd.f32 %v1241, %v1242
        %vm1244 = vcmask 1040384
        %v1245 = vsel %vm1244, %v1206, %v1243
        %1246 = vst [vmem:[%s190] sm:$0x3] %v1245
        %1247 = vst [vmem:[%s183] sm:$0xff] %v1124
        %1248 = vst [vmem:[%s183 + $0x8] sm:$0xff] %v1127
        %1249 = vst [vmem:[%s183 + $0x10] sm:$0xff] %v1132
        %1250 = vst [vmem:[%s183 + $0x18] sm:$0xff] %v1135
        %1251 = vst [vmem:[%s183 + $0x20] sm:$0xff] %v1140
        %1252 = vst [vmem:[%s183 + $0x28] sm:$0xff] %v1143
        %1253 = vst [vmem:[%s183 + $0x30] sm:$0xff] %v1148
        %1254 = vst [vmem:[%s183 + $0x38] sm:$0xff] %v1151
        %1255 = vst [vmem:[%s183 + $0x40] sm:$0xff] %v1156
        %1256 = vst [vmem:[%s183 + $0x48] sm:$0xff] %v1159
        %1257 = vst [vmem:[%s183 + $0x50] sm:$0xff] %v1164
        %1258 = vst [vmem:[%s183 + $0x58] sm:$0xff] %v1167
        %1259 = vst [vmem:[%s183 + $0x60] sm:$0xff] %v1172
        %1260 = vst [vmem:[%s183 + $0x68] sm:$0xff] %v1175
        %1261 = vst [vmem:[%s183 + $0x70] sm:$0xff] %v1180
        %1262 = vst [vmem:[%s183 + $0x78] sm:$0xff] %v1183
        %s1263 = sand.u32 %s90, 1
        %s1264 = scalar_lea.sflag [#allocation4], %s1263
        %s1265 = sand.u32 %s90, 1
        %s1266 = smul.addr %s1265, 128
        %s1267 = scalar_lea.vmem [#allocation3], %s1266
        %s1268 = sand.u32 %s118, 1
        %s1269 = scalar_lea.sflag [#allocation6], %s1268
        %s1270 = sand.u32 %s118, 1
        %s1271 = smul.addr %s1270, 2
        %s1272 = scalar_lea.vmem [#allocation5], %s1271
        // Predicated region
        $region29: #{tpu_custom_call.1} parent=27 // pred_check
          %p1273 = pneg %p100
        $region30: #{tpu_custom_call.1} parent=27 // pred_check_branch
          %1275 = sbr.rel (%p1273) target = $region32
        $region31: #{tpu_custom_call.1} parent=27 // pred_region
          %s1276 = smul.u32 8, %s26
          %s1278 = ssub.s32 2048, 2048
          %1279 = vsyncadd %s1264, %s1278
          %s1280 = smul.addr %s1276, 2
          %s1281 = smul.addr %s25, 32
          %s1282 = sadd.s32 %s1280, %s1281
          %s1283 = smul.addr %s1282, 128
          %s1284 = scalar_lea.hbm %s2, %s1283
          %s1285 = sshll.u32 %s1267, 4
          %s1286 = int_to_ptr.vmem [resolvable:$true] %s1285
          %1291 = dma.vmem_to_hbm [thread:$0]  %s1286, 2048, %s1284, %s1264, 128, 128, 8
        $region32: #{tpu_custom_call.1} parent=27 // pred_fallthru
          _
        // Predicated region
        $region33: #{tpu_custom_call.1} parent=27 // pred_check
          %p1292 = pneg %p128
        $region34: #{tpu_custom_call.1} parent=27 // pred_check_branch
          %1294 = sbr.rel (%p1292) target = $region36
        $region35: #{tpu_custom_call.1} parent=27 // pred_region
          %s1296 = ssub.s32 32, 32
          %1297 = vsyncadd %s1269, %s1296
          %s1298 = smul.addr %s25, 2
          %s1299 = sadd.s32 %s26, %s1298
          %s1300 = smul.addr %s1299, 32
          %s1301 = scalar_lea.hbm %s3, %s1300
          %s1303 = sshll.u32 %s1272, 4
          %s1304 = int_to_ptr.vmem [resolvable:$true] %s1303
          %1306 = dma.vmem_to_hbm [thread:$0]  %s1304, 32, %s1301, %s1269
        $region36: #{tpu_custom_call.1} parent=27 // pred_fallthru
          _
      $region28: #{tpu_custom_call.1} parent=5 // pred_fallthru
        _
      %p1307 = scmp.le.s32.totalorder 2, %s16
      // Predicated region
      $region37: #{tpu_custom_call.1} parent=5 // pred_check
        %p1308 = pneg %p1307
      $region38: #{tpu_custom_call.1} parent=5 // pred_check_branch
        %1310 = sbr.rel (%p1308) target = $region40
      $region39: #{tpu_custom_call.1} parent=5 // pred_region
        %s1311 = ssub.s32 %s16, 2
        // Predicated region
        $region41: #{tpu_custom_call.1} parent=39 // pred_check
          %p1312 = pneg %p106
        $region42: #{tpu_custom_call.1} parent=39 // pred_check_branch
          %1314 = sbr.rel (%p1312) target = $region44
        $region43: #{tpu_custom_call.1} parent=39 // pred_region
          %s1315 = sand.u32 %s91, 1
          %s1316 = scalar_lea.sflag [#allocation4], %s1315
          %s1317 = sand.u32 %s91, 1
          %s1318 = smul.addr %s1317, 128
          %s1319 = scalar_lea.vmem [#allocation3], %s1318
          %1320 = dma.done %s1316, 2048
        $region44: #{tpu_custom_call.1} parent=39 // pred_fallthru
          _
        // Predicated region
        $region45: #{tpu_custom_call.1} parent=39 // pred_check
          %p1321 = pneg %p134
        $region46: #{tpu_custom_call.1} parent=39 // pred_check_branch
          %1323 = sbr.rel (%p1321) target = $region48
        $region47: #{tpu_custom_call.1} parent=39 // pred_region
          %s1324 = sand.u32 %s119, 1
          %s1325 = scalar_lea.sflag [#allocation6], %s1324
          %s1326 = sand.u32 %s119, 1
          %s1327 = smul.addr %s1326, 2
          %s1328 = scalar_lea.vmem [#allocation5], %s1327
          %1329 = dma.done %s1325, 32
        $region48: #{tpu_custom_call.1} parent=39 // pred_fallthru
          _
      $region40: #{tpu_custom_call.1} parent=5 // pred_fallthru
        _
    $region6: #{tpu_custom_call.1} parent=1 // loop_footer
      %s20 = sadd.s32 1, %s16
    $region7: #{tpu_custom_call.1} parent=1 // loop_footer_branch
      %15 = sbr.rel target = $region3
    $region8: #{tpu_custom_call.1} parent=1 // loop_exit
      _
    %1330 = vsyncpa [#allocation4], 1
    %s1331 = scalar_lea.sflag [#allocation4], 1
    %1332 = vsyncpa %s1331, 1
    %1333 = vsyncpa [#allocation6], 1
    %s1334 = scalar_lea.sflag [#allocation6], 1
    %1335 = vsyncpa %s1334, 1

</llo_original>
